<compile_context>
chip_gen: v7x
topology: tpu7x:2x2x1
jax: 0.10.0
libtpu: 0.0.40
codegen_flags: <defaults>
</compile_context>

<pallas_src>
import numpy as np
import jax
import jax.numpy as jnp
from jax import lax
from jax.experimental import pallas as pl
from jax.experimental.pallas import tpu as pltpu

# ----- Config (AUCPRHingeLoss.Config defaults) ------------------------------
NUM_CLASSES = 2
NUM_ANCHORS = 20
PREC_LO = 0.0
PREC_UP = 1.0
_CK = NUM_CLASSES * NUM_ANCHORS

# range_to_anchors_and_delta
_PREC_VALUES = np.linspace(PREC_LO, PREC_UP, NUM_ANCHORS + 1)[1:].astype(np.float32)
_DELTA = (PREC_UP - PREC_LO) / NUM_ANCHORS

# Packed default derived parameters, rows (class-major anchor flattening c*K+k):
#   0: biases               (zeros)
#   1: pos_w = 1 + lam*(1-p) (lam = relu(1) = 1)
#   2: neg_w = lam*p
#   3: lam1mp = lam*(1-p)
_PREC_TILED = np.tile(_PREC_VALUES, NUM_CLASSES).astype(np.float32)
_DEFAULT_PARAMS_NP = np.stack(
    [np.zeros(_CK, np.float32),
     (2.0 - _PREC_TILED).astype(np.float32),
     _PREC_TILED,
     (1.0 - _PREC_TILED).astype(np.float32)]).astype(np.float32)

_PARAMS_CACHE = {}


def _default_params():
    if "default" not in _PARAMS_CACHE:
        _PARAMS_CACHE["default"] = jnp.asarray(_DEFAULT_PARAMS_NP)
    return _PARAMS_CACHE["default"]


# ----- Shared kernel math (all 2-D, lane-dense [N, C*K]) ---------------------
def _aucpr_loss_core(logits, t, params, w, out_ref):
    """logits [N,C] f32, t [N,1] i32, params [4,C*K] f32, w None or [N,C] f32."""
    N, C = logits.shape
    CK = params.shape[1]
    K = CK // C

    biases = params[0:1, :]     # [1, CK]
    pos_w = params[1:2, :]      # 1 + lam*(1-p)
    neg_w = params[2:3, :]      # lam*p
    lam1mp = params[3:4, :]     # lam*(1-p)

    lane = lax.broadcasted_iota(jnp.int32, (N, CK), 1)
    lo = t * K                                              # [N,1] first lane of target class
    is_pos = jnp.logical_and(lane >= lo, lane < lo + K)     # [N, CK] bool one-hot blocks

    # lane-repeat logits (and weights) from [N, C] to [N, C*K]; C is tiny & static.
    x = jnp.zeros((N, CK), jnp.float32)
    wf = None if w is None else jnp.zeros((N, CK), jnp.float32)
    for c in range(C):
        sel = jnp.logical_and(lane >= c * K, lane < (c + 1) * K)
        x = jnp.where(sel, logits[:, c:c + 1], x)
        if w is not None:
            wf = jnp.where(sel, w[:, c:c + 1], wf)

    z = x - biases                                          # [N, CK]
    # labels are exactly 0/1 → select form is identical to the weighted sum form
    hinge = jnp.where(is_pos,
                      pos_w * jnp.maximum(1.0 - z, 0.0),
                      neg_w * jnp.maximum(1.0 + z, 0.0))

    if w is None:
        # default weights == 1: skip the per-element weight multiply entirely
        hinge_col = jnp.sum(hinge, axis=0, keepdims=True)                 # [1, CK]
        pos_count = jnp.sum(is_pos.astype(jnp.float32), axis=0, keepdims=True)
        priors = (pos_count + 1.0) / jnp.float32(N + 2)
    else:
        hinge_col = jnp.sum(wf * hinge, axis=0, keepdims=True)
        lab = is_pos.astype(jnp.float32)
        priors = ((jnp.sum(wf * lab, axis=0, keepdims=True) + 1.0)
                  / (jnp.sum(wf, axis=0, keepdims=True) + 2.0))

    # lambda_term is independent of n → fold as N * sum_j(priors_j * lam1mp_j)
    per_col = hinge_col - jnp.float32(N) * priors * lam1mp                # [1, CK]
    total = jnp.sum(per_col)
    out_ref[0, 0] = total * jnp.float32(_DELTA / ((PREC_UP - PREC_LO) * N * C))


def _aucpr_hinge_kernel(logits_ref, targets_ref, params_ref, out_ref):
    _aucpr_loss_core(logits_ref[...], targets_ref[...], params_ref[...], None, out_ref)


def _aucpr_hinge_kernel_weighted(logits_ref, targets_ref, weights_ref, params_ref,
                                 out_ref):
    _aucpr_loss_core(logits_ref[...], targets_ref[...], params_ref[...],
                     weights_ref[...], out_ref)


# ----- Wrapper ---------------------------------------------------------------
def aucpr_hinge_loss(logits, targets, weights=None, biases=None, lambdas=None):
    N, C = logits.shape
    if C != NUM_CLASSES:
        raise ValueError(f"num classes is {NUM_CLASSES} while logits width is {C}")
    CK = C * NUM_ANCHORS

    if logits.dtype != jnp.float32:
        logits = logits.astype(jnp.float32)
    targets = jnp.reshape(targets, (N, 1))
    if targets.dtype != jnp.int32:
        targets = targets.astype(jnp.int32)

    if biases is None and lambdas is None:
        params = _default_params()
    else:
        b = (jnp.zeros((C, NUM_ANCHORS), jnp.float32) if biases is None
             else jnp.asarray(biases, jnp.float32)).reshape(1, CK)
        lam = jnp.maximum(
            (jnp.ones((C, NUM_ANCHORS), jnp.float32) if lambdas is None
             else jnp.asarray(lambdas, jnp.float32)).reshape(1, CK), 0.0)
        prec = jnp.asarray(_PREC_TILED.reshape(1, CK))
        lam1mp = lam * (1.0 - prec)
        params = jnp.concatenate([b, 1.0 + lam1mp, lam * prec, lam1mp], axis=0)

    vmem = pl.BlockSpec(memory_space=pltpu.MemorySpace.VMEM)
    smem_out = pl.BlockSpec(memory_space=pltpu.MemorySpace.SMEM)

    if weights is None:
        out = pl.pallas_call(
            _aucpr_hinge_kernel,
            out_shape=jax.ShapeDtypeStruct((1, 1), jnp.float32),
            in_specs=[vmem, vmem, vmem],
            out_specs=smem_out,
        )(logits, targets, params)
    else:
        w = jnp.asarray(weights, jnp.float32)
        if w.ndim == 1:
            w = w.reshape(N, 1)
        w = jnp.broadcast_to(w, (N, C)).astype(jnp.float32)
        out = pl.pallas_call(
            _aucpr_hinge_kernel_weighted,
            out_shape=jax.ShapeDtypeStruct((1, 1), jnp.float32),
            in_specs=[vmem, vmem, vmem, vmem],
            out_specs=smem_out,
        )(logits, targets, w, params)
    return out[0, 0]


# ----- Pure-JAX reference (for correctness check) ----------------------------
def _reference(logits, targets, weights=None, biases=None, lambdas=None):
    N, C = logits.shape
    labels = jax.nn.one_hot(targets, C, dtype=jnp.float32)
    if weights is None:
        w = jnp.ones((N, 1), jnp.float32)
    else:
        w = jnp.asarray(weights, jnp.float32)
        if w.ndim == 1:
            w = w.reshape(N, 1)
    lam = jnp.maximum(
        jnp.ones((C, NUM_ANCHORS), jnp.float32) if lambdas is None
        else jnp.asarray(lambdas, jnp.float32), 0.0)
    b = (jnp.zeros((C, NUM_ANCHORS), jnp.float32) if biases is None
         else jnp.asarray(biases, jnp.float32))
    prec = jnp.asarray(_PREC_VALUES)[None, :]
    z = logits[:, :, None] - b[None]
    hinge = ((1.0 + lam * (1.0 - prec))[None] * labels[:, :, None]
             * jnp.maximum(1.0 - z, 0.0)
             + (lam * prec)[None] * (1.0 - labels[:, :, None])
             * jnp.maximum(1.0 + z, 0.0))
    priors = ((w * labels).sum(0) + 1.0) / (w.sum(0) + 2.0)
    lambda_term = priors[:, None] * (lam * (1.0 - prec))
    per_anchor = w[:, :, None] * hinge - lambda_term[None]
    loss = per_anchor.sum(2) * _DELTA / (PREC_UP - PREC_LO)
    return loss.mean()


if __name__ == "__main__":
    key = jax.random.PRNGKey(0)
    k1, k2, k3 = jax.random.split(key, 3)
    N = 8
    logits = jax.random.normal(k1, (N, NUM_CLASSES), dtype=jnp.float32)
    targets = jax.random.randint(k2, (N,), 0, NUM_CLASSES, dtype=jnp.int32)

    # default (weights=None) fast path
    loss = aucpr_hinge_loss(logits, targets)
    jax.block_until_ready(loss)
    ref = _reference(logits, targets)
    assert abs(float(loss) - float(ref)) < 1e-5, (float(loss), float(ref))

    # weighted path
    w = jax.random.uniform(k3, (N,), dtype=jnp.float32) + 0.5
    loss_w = aucpr_hinge_loss(logits, targets, weights=w)
    jax.block_until_ready(loss_w)
    ref_w = _reference(logits, targets, weights=w)
    assert abs(float(loss_w) - float(ref_w)) < 1e-5, (float(loss_w), float(ref_w))

    # non-default parameters (exercises the custom-params host path)
    kb, kl = jax.random.split(k3)
    biases = 0.1 * jax.random.normal(kb, (NUM_CLASSES, NUM_ANCHORS), jnp.float32)
    lambdas = jax.random.normal(kl, (NUM_CLASSES, NUM_ANCHORS), jnp.float32)
    loss_p = aucpr_hinge_loss(logits, targets, biases=biases, lambdas=lambdas)
    jax.block_until_ready(loss_p)
    ref_p = _reference(logits, targets, biases=biases, lambdas=lambdas)
    assert abs(float(loss_p) - float(ref_p)) < 1e-5, (float(loss_p), float(ref_p))

    print("KERNEL_OK")
</pallas_src>

<mosaic_0001>
module attributes {stable_mosaic.version = 11 : i64} {
  func.func @_aucpr_hinge_kernel(%arg0: memref<8x2xf32, #tpu.memory_space<vmem>>, %arg1: memref<8x1xi32, #tpu.memory_space<vmem>>, %arg2: memref<4x40xf32, #tpu.memory_space<vmem>>, %arg3: memref<1x1xf32, #tpu.memory_space<smem>>) attributes {dimension_semantics = [], scalar_prefetch = 0 : i64, scratch_operands = 0 : i64, tpu.core_type = #tpu.core_type<tc>} {
    %c0 = arith.constant 0 : index
    %c0_0 = arith.constant 0 : index
    %0 = vector.load %arg0[%c0, %c0_0] : memref<8x2xf32, #tpu.memory_space<vmem>>, vector<8x2xf32>
    %c0_1 = arith.constant 0 : index
    %c0_2 = arith.constant 0 : index
    %1 = vector.load %arg1[%c0_1, %c0_2] : memref<8x1xi32, #tpu.memory_space<vmem>>, vector<8x1xi32>
    %c0_3 = arith.constant 0 : index
    %c0_4 = arith.constant 0 : index
    %2 = vector.load %arg2[%c0_3, %c0_4] : memref<4x40xf32, #tpu.memory_space<vmem>>, vector<4x40xf32>
    %3 = vector.extract_strided_slice %2 {offsets = [0, 0], sizes = [1, 40], strides = [1, 1]} : vector<4x40xf32> to vector<1x40xf32>
    %4 = vector.extract_strided_slice %2 {offsets = [1, 0], sizes = [1, 40], strides = [1, 1]} : vector<4x40xf32> to vector<1x40xf32>
    %5 = vector.extract_strided_slice %2 {offsets = [2, 0], sizes = [1, 40], strides = [1, 1]} : vector<4x40xf32> to vector<1x40xf32>
    %6 = vector.extract_strided_slice %2 {offsets = [3, 0], sizes = [1, 40], strides = [1, 1]} : vector<4x40xf32> to vector<1x40xf32>
    %7 = tpu.iota {dimensions = array<i32: 1>} : vector<8x40xi32>
    %c20_i32 = arith.constant 20 : i32
    %8 = vector.broadcast %c20_i32 : i32 to vector<8x1xi32>
    %9 = arith.muli %1, %8 : vector<8x1xi32>
    %10 = vector.broadcast %9 : vector<8x1xi32> to vector<8x40xi32>
    %11 = arith.cmpi sge, %7, %10 : vector<8x40xi32>
    %c20_i32_5 = arith.constant 20 : i32
    %12 = vector.broadcast %c20_i32_5 : i32 to vector<8x1xi32>
    %13 = arith.addi %9, %12 : vector<8x1xi32>
    %14 = vector.broadcast %13 : vector<8x1xi32> to vector<8x40xi32>
    %15 = arith.cmpi slt, %7, %14 : vector<8x40xi32>
    %16 = arith.andi %11, %15 : vector<8x40xi1>
    %cst = arith.constant 0.000000e+00 : f32
    %17 = vector.broadcast %cst : f32 to vector<8x40xf32>
    %c0_i32 = arith.constant 0 : i32
    %18 = vector.broadcast %c0_i32 : i32 to vector<8x40xi32>
    %19 = arith.cmpi sge, %7, %18 : vector<8x40xi32>
    %c20_i32_6 = arith.constant 20 : i32
    %20 = vector.broadcast %c20_i32_6 : i32 to vector<8x40xi32>
    %21 = arith.cmpi slt, %7, %20 : vector<8x40xi32>
    %22 = arith.andi %19, %21 : vector<8x40xi1>
    %23 = vector.extract_strided_slice %0 {offsets = [0, 0], sizes = [8, 1], strides = [1, 1]} : vector<8x2xf32> to vector<8x1xf32>
    %24 = vector.shape_cast %23 : vector<8x1xf32> to vector<8x1xf32>
    %25 = vector.broadcast %24 : vector<8x1xf32> to vector<8x40xf32>
    %26 = arith.select %22, %25, %17 : vector<8x40xi1>, vector<8x40xf32>
    %c20_i32_7 = arith.constant 20 : i32
    %27 = vector.broadcast %c20_i32_7 : i32 to vector<8x40xi32>
    %28 = arith.cmpi sge, %7, %27 : vector<8x40xi32>
    %c40_i32 = arith.constant 40 : i32
    %29 = vector.broadcast %c40_i32 : i32 to vector<8x40xi32>
    %30 = arith.cmpi slt, %7, %29 : vector<8x40xi32>
    %31 = arith.andi %28, %30 : vector<8x40xi1>
    %32 = vector.extract_strided_slice %0 {offsets = [0, 1], sizes = [8, 1], strides = [1, 1]} : vector<8x2xf32> to vector<8x1xf32>
    %33 = vector.shape_cast %32 : vector<8x1xf32> to vector<8x1xf32>
    %34 = vector.broadcast %33 : vector<8x1xf32> to vector<8x40xf32>
    %35 = arith.select %31, %34, %26 : vector<8x40xi1>, vector<8x40xf32>
    %36 = vector.broadcast %3 : vector<1x40xf32> to vector<8x40xf32>
    %37 = arith.subf %35, %36 : vector<8x40xf32>
    %cst_8 = arith.constant 1.000000e+00 : f32
    %38 = vector.broadcast %cst_8 : f32 to vector<8x40xf32>
    %39 = arith.subf %38, %37 : vector<8x40xf32>
    %cst_9 = arith.constant 0.000000e+00 : f32
    %40 = vector.broadcast %cst_9 : f32 to vector<8x40xf32>
    %41 = arith.maximumf %39, %40 : vector<8x40xf32>
    %42 = vector.broadcast %4 : vector<1x40xf32> to vector<8x40xf32>
    %43 = arith.mulf %42, %41 : vector<8x40xf32>
    %cst_10 = arith.constant 1.000000e+00 : f32
    %44 = vector.broadcast %cst_10 : f32 to vector<8x40xf32>
    %45 = arith.addf %44, %37 : vector<8x40xf32>
    %cst_11 = arith.constant 0.000000e+00 : f32
    %46 = vector.broadcast %cst_11 : f32 to vector<8x40xf32>
    %47 = arith.maximumf %45, %46 : vector<8x40xf32>
    %48 = vector.broadcast %5 : vector<1x40xf32> to vector<8x40xf32>
    %49 = arith.mulf %48, %47 : vector<8x40xf32>
    %50 = arith.select %16, %43, %49 : vector<8x40xi1>, vector<8x40xf32>
    %cst_12 = arith.constant dense<0.000000e+00> : vector<40xf32>
    %51 = vector.multi_reduction <add>, %50, %cst_12 [0] : vector<8x40xf32> to vector<40xf32>
    %52 = vector.shape_cast %51 : vector<40xf32> to vector<1x40xf32>
    %53 = arith.extui %16 : vector<8x40xi1> to vector<8x40xi32>
    %54 = arith.sitofp %53 : vector<8x40xi32> to vector<8x40xf32>
    %cst_13 = arith.constant dense<0.000000e+00> : vector<40xf32>
    %55 = vector.multi_reduction <add>, %54, %cst_13 [0] : vector<8x40xf32> to vector<40xf32>
    %56 = vector.shape_cast %55 : vector<40xf32> to vector<1x40xf32>
    %cst_14 = arith.constant 1.000000e+00 : f32
    %57 = vector.broadcast %cst_14 : f32 to vector<1x40xf32>
    %58 = arith.addf %56, %57 : vector<1x40xf32>
    %cst_15 = arith.constant 1.000000e+01 : f32
    %59 = vector.broadcast %cst_15 : f32 to vector<1x40xf32>
    %60 = arith.divf %58, %59 : vector<1x40xf32>
    %cst_16 = arith.constant 8.000000e+00 : f32
    %61 = vector.broadcast %cst_16 : f32 to vector<1x40xf32>
    %62 = arith.mulf %61, %60 : vector<1x40xf32>
    %63 = arith.mulf %62, %6 : vector<1x40xf32>
    %64 = arith.subf %52, %63 : vector<1x40xf32>
    %65 = vector.shape_cast %64 : vector<1x40xf32> to vector<1x1x40xf32>
    %cst_17 = arith.constant dense<0.000000e+00> : vector<1xf32>
    %66 = vector.multi_reduction <add>, %65, %cst_17 [1, 2] : vector<1x1x40xf32> to vector<1xf32>
    %67 = vector.shape_cast %66 : vector<1xf32> to vector<1x1x1xf32>
    %68 = vector.extract %67[0, 0, 0] : f32 from vector<1x1x1xf32>
    %cst_18 = arith.constant 3.125000e-03 : f32
    %69 = arith.mulf %68, %cst_18 : f32
    %c0_19 = arith.constant 0 : index
    %c0_20 = arith.constant 0 : index
    %70 = memref.load %arg3[%c0_19, %c0_20] : memref<1x1xf32, #tpu.memory_space<smem>>
    memref.store %69, %arg3[%c0_19, %c0_20] : memref<1x1xf32, #tpu.memory_space<smem>>
    return
  }
}

</mosaic_0001>

<llo_original>
// kernel: tpu_custom_call.1
$region0: #{tpu_custom_call.1}
  #allocation0 [shape = 'u32[]', space=smem, size = 0x4, offset = 0x4, fixed_abs, tag = 'smem constant byte address 0x4 - core index']
  #allocation1 [shape = 'u32[144,128]{1,0:T(1,128)}', space=vmem, size = 0x12000, scoped, tag = 'internal scratch']
  %s0 = inlined_call_operand.vmem [shape: f32[8,2], index: 0, kind: input, shape index: {}]
  %s1 = inlined_call_operand.vmem [shape: s32[8,1], index: 1, kind: input, shape index: {}]
  %s2 = inlined_call_operand.vmem [shape: f32[4,40], index: 2, kind: input, shape index: {}]
  %s3 = inlined_call_operand.hbm [shape: f32[1,1], index: 3, kind: output, shape index: {}]
  %s4 = sld [smem:[#allocation0]]
  $region22: #{tpu_custom_call.1} parent=0
    _
  %s6 = ssub.s32 1, %s4
  %s7 = scalar_select 0, %s6, %s4
  $region1: #{tpu_custom_call.1} parent=0
    #allocation2 [shape = 'u8[512]{0}', space=smem, size = 0x200, scoped, tag = 'output window, operand 0, single buffered']
    #allocation3 [shape = 's32[1]{0}', space=sflag, size = 0x4, scoped, tag = 'scoped memory for tpu_custom_call.1']
    %8 = vsyncpa [#allocation3], 0
    // Predicated region
    $region2: #{tpu_custom_call.1} parent=1 // pred_check
      _
    $region3: #{tpu_custom_call.1} parent=1 // pred_check_branch
      %10 = sbr.rel (0) target = $region5
    $region4: #{tpu_custom_call.1} parent=1 // pred_region
      _
    $region5: #{tpu_custom_call.1} parent=1 // pred_fallthru
      _
    // Predicated region
    $region6: #{tpu_custom_call.1} parent=1 // pred_check
      _
    $region7: #{tpu_custom_call.1} parent=1 // pred_check_branch
      %12 = sbr.rel (0) target = $region9
    $region8: #{tpu_custom_call.1} parent=1 // pred_region
      _
    $region9: #{tpu_custom_call.1} parent=1 // pred_fallthru
      _
    // Predicated region
    $region10: #{tpu_custom_call.1} parent=1 // pred_check
      _
    $region11: #{tpu_custom_call.1} parent=1 // pred_check_branch
      %14 = sbr.rel (0) target = $region13
    $region12: #{tpu_custom_call.1} parent=1 // pred_region
      _
    $region13: #{tpu_custom_call.1} parent=1 // pred_fallthru
      _
    %v15 = vld [vmem:[%s0] sm:$0xff]
    %v16 = vld [vmem:[%s1] sm:$0xff]
    %v17 = vld [vmem:[%s2] sm:$0xf]
    %v18 = vlaneseq
    %v19 = vand.u32 %v18, 127
    %v20 = vmul.u32 %v16, 20
    %21 = vset.pattern.permute.xlu0 0
    %22 = vperm.xlu0 %21, %v20
    %v23 = vpop.permute.xlu0 %22
    %vm24 = vcmp.ge.s32.totalorder %v19, %v23
    %v25 = vadd.s32 %v20, 20
    %26 = vset.pattern.permute.xlu0 0
    %27 = vperm.xlu0 %26, %v25
    %v28 = vpop.permute.xlu0 %27
    %vm29 = vcmp.lt.s32.totalorder %v19, %v28
    %vm30 = vmand %vm24, %vm29
    %vm31 = vcmp.ge.s32.totalorder %v19, 0
    %vm32 = vcmp.lt.s32.totalorder %v19, 20
    %vm33 = vmand %vm31, %vm32
    %35 = vset.pattern.permute.xlu0 0
    %36 = vperm.xlu0 %35, %v15
    %v37 = vpop.permute.xlu0 %36
    %v39 = vsel %vm33, %v37, 0.0
    %vm40 = vcmp.ge.s32.totalorder %v19, 20
    %vm41 = vcmp.lt.s32.totalorder %v19, 40
    %vm42 = vmand %vm40, %vm41
    %43 = vset.pattern.permute.xlu0 1
    %44 = vperm.xlu0 %43, %v15
    %v45 = vpop.permute.xlu0 %44
    %v47 = vsel %vm42, %v45, %v39
    %v48 = vlaneseq
    %v49 = vshrl.u32 %v48, 7
    %v50 = vsub.s32 0, %v49
    %v51 = vrot.slane %v17, %v50
    %v52 = vsub.f32 %v47, %v51
    %v53 = vsub.f32 1.0, %v52
    %v54 = vmax.f32 %v53, 0.0
    %v55 = vlaneseq
    %v56 = vshrl.u32 %v55, 7
    %v57 = vsub.s32 1, %v56
    %v58 = vrot.slane %v17, %v57
    %v59 = vmul.f32 %v58, %v54
    %v60 = vadd.f32 %v52, 1.0
    %v61 = vmax.f32 %v60, 0.0
    %v62 = vlaneseq
    %v63 = vshrl.u32 %v62, 7
    %v64 = vsub.s32 2, %v63
    %v65 = vrot.slane %v17, %v64
    %v66 = vmul.f32 %v65, %v61
    %v67 = vsel %vm30, %v59, %v66
    %vm68 = vcmask 326656
    %v69 = vsel %vm68, %v67, 0.0
    %v70 = vrot.slane %v69, 4
    %v71 = vadd.f32 %v69, %v70
    %v72 = vrot.slane %v71, 2
    %v73 = vadd.f32 %v71, %v72
    %v74 = vrot.slane %v73, 1
    %v75 = vadd.f32 %v73, %v74
    %v76 = vsel %vm30, 1, 0
    %v77 = vcvt.s32.f32 %v76
    %v78 = vsel %vm68, %v77, 0.0
    %v79 = vrot.slane %v78, 4
    %v80 = vadd.f32 %v78, %v79
    %v81 = vrot.slane %v80, 2
    %v82 = vadd.f32 %v80, %v81
    %v83 = vrot.slane %v82, 1
    %v84 = vadd.f32 %v82, %v83
    %v85 = vadd.f32 %v84, 1.0
    %v86 = vrcp.pop 10.0
    %v87 = vmul.f32 %v85, %v86
    %v88 = vmul.f32 %v87, 8.0
    %v89 = vmul.f32 %v88, %v17
    %v90 = vsub.f32 %v75, %v89
    %v92 = vrot.slane %v90, 3
    %vm94 = vcmask 319488
    %v95 = vsel %vm94, %v92, 0.0
    %96 = vadd.xlane.f32.xlu0 %v95
    %v97 = vpop.xlane.xlu0 %96
    %v98 = vrot.slane %v97, 4
    %v99 = vadd.f32 %v97, %v98
    %v100 = vrot.slane %v99, 2
    %v101 = vadd.f32 %v99, %v100
    %v102 = vrot.slane %v101, 1
    %v103 = vadd.f32 %v101, %v102
    %s104 = vtos %v103
    %s105 = smul.f32 %s104, 0.003125
    %s106 = scalar_lea.smem [#allocation2], 0
    %107 = sst [smem:[%s106]] %s105
    // Predicated region
    $region14: #{tpu_custom_call.1} parent=1 // pred_check
      _
    $region15: #{tpu_custom_call.1} parent=1 // pred_check_branch
      %109 = sbr.rel (0) target = $region17
    $region16: #{tpu_custom_call.1} parent=1 // pred_region
      %s111 = ssub.s32 16, 16
      %112 = vsyncadd [#allocation3], %s111
      %115 = dma.smem_to_hbm [#allocation2], 16, %s3, [#allocation3]
    $region17: #{tpu_custom_call.1} parent=1 // pred_fallthru
      _
    // Predicated region
    $region18: #{tpu_custom_call.1} parent=1 // pred_check
      _
    $region19: #{tpu_custom_call.1} parent=1 // pred_check_branch
      %117 = sbr.rel (0) target = $region21
    $region20: #{tpu_custom_call.1} parent=1 // pred_region
      %118 = dma.done [#allocation3], 16
    $region21: #{tpu_custom_call.1} parent=1 // pred_fallthru
      _
    %119 = sfence
    %120 = vsyncpa [#allocation3], 1

</llo_original>
